<compile_context>
chip_gen: v5e
topology: v5e:2x2
jax: 0.10.0
libtpu: 0.0.40
codegen_flags: <defaults>
</compile_context>

<pallas_src>
import functools

import jax
import jax.numpy as jnp
from jax.experimental import pallas as pl
from jax.experimental.pallas import tpu as pltpu


_NUM_SPLITS = 2          # leading "parallel" grid axis (2 TCs on v7x)
_ROW_ALIGN = 16          # multiple of 16 keeps bf16 tiles packed too
_LANE = 128
_MAX_TILE_ROWS = 2048


def _round_up(x, m):
    return ((x + m - 1) // m) * m


_BUDGETS = None


def _vmem_budgets():
    """(data_budget_bytes, vmem_limit_bytes) per TPU generation."""
    global _BUDGETS
    if _BUDGETS is None:
        cap = None
        try:
            info = pltpu.get_tpu_info()
            cap = getattr(info, "vmem_capacity_bytes", None)
        except Exception:  # pragma: no cover - be safe off-TPU / old jax
            cap = None
        if cap is None:
            cap = 64 * 1024 * 1024            # conservative (v7x per-TC)
        if cap >= 96 * 1024 * 1024:           # v5e / v6e: 128 MiB VMEM
            _BUDGETS = (64 * 1024 * 1024, 96 * 1024 * 1024)
        else:                                  # v7x: 64 MiB per TC
            _BUDGETS = (20 * 1024 * 1024, 48 * 1024 * 1024)
    return _BUDGETS


def _choose_tile_rows(n_rows, input_row_bytes, temp_row_bytes):
    """Largest row tile s.t. double-buffered inputs + f32 temporaries fit."""
    budget, _ = _vmem_budgets()
    per_row = 2 * input_row_bytes + temp_row_bytes
    cap = max(_ROW_ALIGN, budget // max(1, per_row))
    per_split = _round_up(-(-n_rows // _NUM_SPLITS), _ROW_ALIGN)
    tile = min(_MAX_TILE_ROWS, cap, max(_ROW_ALIGN, per_split))
    return max(_ROW_ALIGN, (tile // _ROW_ALIGN) * _ROW_ALIGN)


def _split_layout(n_rows, tile):
    """grid layout: (#splits, inner steps, padded row count for small arrays)."""
    total_blocks = -(-n_rows // tile)
    splits = _NUM_SPLITS if total_blocks >= _NUM_SPLITS else 1
    inner = -(-total_blocks // splits)
    np_small = splits * inner * tile
    return splits, inner, total_blocks, np_small


# --------------------------------------------------------------------------
# Masked cross-entropy:  mean over valid tokens of  logsumexp(x) - x[target]
# --------------------------------------------------------------------------
def _masked_ce_kernel(logits_ref, tgt_ref, mask_ref, loss_ref, cnt_ref,
                      acc_ref, msk_ref):
    i = pl.program_id(1)

    @pl.when(i == 0)
    def _():
        acc_ref[...] = jnp.zeros_like(acc_ref)
        msk_ref[...] = jnp.zeros_like(msk_ref)

    x = logits_ref[...].astype(jnp.float32)                       # [R, V]
    m = jnp.max(x, axis=-1, keepdims=True)                        # [R, 1]
    xm = x - m
    se = jnp.sum(jnp.exp(xm), axis=-1, keepdims=True)             # [R, 1]
    ids = jax.lax.broadcasted_iota(jnp.int32, x.shape, 1)         # [R, V]
    picked_m = jnp.sum(jnp.where(ids == tgt_ref[...], xm, 0.0),
                       axis=-1, keepdims=True)                    # x[tgt] - m
    row_loss = jnp.log(se) - picked_m                             # lse - x[tgt]

    msk = mask_ref[...]                                           # [R, 1] f32
    # select (not multiply): garbage tail rows may carry NaN/inf.
    acc_ref[...] += jnp.where(msk > 0.0, row_loss, 0.0)
    msk_ref[...] += msk

    @pl.when(i == pl.num_programs(1) - 1)
    def _():
        loss_ref[...] = jnp.broadcast_to(jnp.sum(acc_ref[...]), loss_ref.shape)
        cnt_ref[...] = jnp.broadcast_to(jnp.sum(msk_ref[...]), cnt_ref.shape)


def masked_ce_loss(logits, targets, mask):
    """logits: [B, T, V] float; targets: [B, T] int; mask: [B, T] (1 = valid)."""
    B, T, V = logits.shape
    N = B * T

    logits2 = logits.reshape(N, V)                # no copy, stays native dtype
    tgt2 = targets.reshape(N, 1).astype(jnp.int32)
    mask2 = mask.reshape(N, 1).astype(jnp.float32)

    in_row = V * jnp.dtype(logits.dtype).itemsize + 8
    tmp_row = 4 * V * 4        # x (f32), exp, iota (i32), select temporaries
    tile = _choose_tile_rows(N, in_row, tmp_row)
    splits, inner, total_blocks, np_small = _split_layout(N, tile)
    if np_small != N:          # pad only the tiny per-row arrays (mask -> 0)
        tgt2 = jnp.pad(tgt2, ((0, np_small - N), (0, 0)))
        mask2 = jnp.pad(mask2, ((0, np_small - N), (0, 0)))

    max_blk = total_blocks - 1
    big_map = lambda c, i: (jnp.minimum(c * inner + i, max_blk), 0)
    small_map = lambda c, i: (c * inner + i, 0)
    part_map = lambda c, i: (c, 0, 0)

    loss_parts, cnt_parts = pl.pallas_call(
        _masked_ce_kernel,
        out_shape=(jax.ShapeDtypeStruct((splits, 1, _LANE), jnp.float32),
                   jax.ShapeDtypeStruct((splits, 1, _LANE), jnp.float32)),
        grid_spec=pltpu.PrefetchScalarGridSpec(
            num_scalar_prefetch=0,
            grid=(splits, inner),
            in_specs=[
                pl.BlockSpec((tile, V), big_map),
                pl.BlockSpec((tile, 1), small_map),
                pl.BlockSpec((tile, 1), small_map),
            ],
            out_specs=[
                pl.BlockSpec((1, 1, _LANE), part_map),
                pl.BlockSpec((1, 1, _LANE), part_map),
            ],
            scratch_shapes=[pltpu.VMEM((tile, 1), jnp.float32),
                            pltpu.VMEM((tile, 1), jnp.float32)],
        ),
        compiler_params=pltpu.CompilerParams(
            dimension_semantics=("parallel", "arbitrary"),
            vmem_limit_bytes=_vmem_budgets()[1]),
    )(logits2, tgt2, mask2)

    loss_sum = jnp.sum(loss_parts[:, 0, 0])
    cnt = jnp.sum(cnt_parts[:, 0, 0])
    return loss_sum / jnp.maximum(cnt, 1.0)


# --------------------------------------------------------------------------
# Masked KL divergence: mean over valid tokens of sum_v t*(log t - logsoftmax(x))
#   = sum_v t*(log t - x) + lse(x) * sum_v t      (exact identity)
# --------------------------------------------------------------------------
def _masked_kl_kernel(logits_ref, tprob_ref, mask_ref, loss_ref, cnt_ref,
                      acc_ref, msk_ref):
    i = pl.program_id(1)

    @pl.when(i == 0)
    def _():
        acc_ref[...] = jnp.zeros_like(acc_ref)
        msk_ref[...] = jnp.zeros_like(msk_ref)

    x = logits_ref[...].astype(jnp.float32)                       # [R, V]
    m = jnp.max(x, axis=-1, keepdims=True)
    lse = jnp.log(jnp.sum(jnp.exp(x - m), axis=-1, keepdims=True)) + m

    t = tprob_ref[...].astype(jnp.float32)                        # [R, V]
    # t == 0 contributes exactly 0 (0 * finite); no extra select needed.
    terms = t * (jnp.log(jnp.maximum(t, 1e-30)) - x)
    kl = (jnp.sum(terms, axis=-1, keepdims=True)
          + lse * jnp.sum(t, axis=-1, keepdims=True))             # [R, 1]

    msk = mask_ref[...]
    acc_ref[...] += jnp.where(msk > 0.0, kl, 0.0)
    msk_ref[...] += msk

    @pl.when(i == pl.num_programs(1) - 1)
    def _():
        loss_ref[...] = jnp.broadcast_to(jnp.sum(acc_ref[...]), loss_ref.shape)
        cnt_ref[...] = jnp.broadcast_to(jnp.sum(msk_ref[...]), cnt_ref.shape)


def masked_kl_loss(logits, target_probs, mask):
    B, T, V = logits.shape
    N = B * T

    logits2 = logits.reshape(N, V)
    tprob2 = target_probs.reshape(N, V)           # stays native dtype on HBM
    mask2 = mask.reshape(N, 1).astype(jnp.float32)

    in_row = V * (jnp.dtype(logits.dtype).itemsize
                  + jnp.dtype(target_probs.dtype).itemsize) + 4
    tmp_row = 5 * V * 4
    tile = _choose_tile_rows(N, in_row, tmp_row)
    splits, inner, total_blocks, np_small = _split_layout(N, tile)
    if np_small != N:
        mask2 = jnp.pad(mask2, ((0, np_small - N), (0, 0)))

    max_blk = total_blocks - 1
    big_map = lambda c, i: (jnp.minimum(c * inner + i, max_blk), 0)
    small_map = lambda c, i: (c * inner + i, 0)
    part_map = lambda c, i: (c, 0, 0)

    loss_parts, cnt_parts = pl.pallas_call(
        _masked_kl_kernel,
        out_shape=(jax.ShapeDtypeStruct((splits, 1, _LANE), jnp.float32),
                   jax.ShapeDtypeStruct((splits, 1, _LANE), jnp.float32)),
        grid_spec=pltpu.PrefetchScalarGridSpec(
            num_scalar_prefetch=0,
            grid=(splits, inner),
            in_specs=[
                pl.BlockSpec((tile, V), big_map),
                pl.BlockSpec((tile, V), big_map),
                pl.BlockSpec((tile, 1), small_map),
            ],
            out_specs=[
                pl.BlockSpec((1, 1, _LANE), part_map),
                pl.BlockSpec((1, 1, _LANE), part_map),
            ],
            scratch_shapes=[pltpu.VMEM((tile, 1), jnp.float32),
                            pltpu.VMEM((tile, 1), jnp.float32)],
        ),
        compiler_params=pltpu.CompilerParams(
            dimension_semantics=("parallel", "arbitrary"),
            vmem_limit_bytes=_vmem_budgets()[1]),
    )(logits2, tprob2, mask2)

    loss_sum = jnp.sum(loss_parts[:, 0, 0])
    cnt = jnp.sum(cnt_parts[:, 0, 0])
    return loss_sum / jnp.maximum(cnt, 1.0)


# --------------------------------------------------------------------------
# MAE loss:  mean |pred - target|
# --------------------------------------------------------------------------
def _mae_kernel(pred_ref, tgt_ref, loss_ref, acc_ref, *,
                inner, tile_rows, n_rows):
    i = pl.program_id(1)

    @pl.when(i == 0)
    def _():
        acc_ref[...] = jnp.zeros_like(acc_ref)

    # Row validity rebuilt from the grid position: kills the ragged tail of
    # the last block and any clamped duplicate block.
    gblk = pl.program_id(0) * inner + i
    row0 = gblk * tile_rows
    rid = jax.lax.broadcasted_iota(jnp.int32, (tile_rows, 1), 0) + row0
    valid = rid < n_rows

    diff = jnp.abs(pred_ref[...].astype(jnp.float32)
                   - tgt_ref[...].astype(jnp.float32))
    diff = jnp.where(valid, diff, 0.0)
    # lane-dense accumulator: reduce over the row (sublane) axis per step.
    acc_ref[...] += jnp.sum(diff, axis=0, keepdims=True)          # [1, D]

    @pl.when(i == pl.num_programs(1) - 1)
    def _():
        loss_ref[...] = jnp.broadcast_to(jnp.sum(acc_ref[...]), loss_ref.shape)


def mae_loss(pred, target):
    """pred, target: [..., D] float (leading dims flattened)."""
    D = pred.shape[-1]
    pred2 = pred.reshape(-1, D)
    tgt2 = target.reshape(-1, D)
    N = pred2.shape[0]

    in_row = D * (jnp.dtype(pred.dtype).itemsize
                  + jnp.dtype(target.dtype).itemsize)
    tmp_row = 3 * D * 4
    tile = _choose_tile_rows(N, in_row, tmp_row)
    splits, inner, total_blocks, _ = _split_layout(N, tile)

    max_blk = total_blocks - 1
    big_map = lambda c, i: (jnp.minimum(c * inner + i, max_blk), 0)
    part_map = lambda c, i: (c, 0, 0)

    kernel = functools.partial(_mae_kernel, inner=inner, tile_rows=tile,
                               n_rows=N)

    loss_parts = pl.pallas_call(
        kernel,
        out_shape=jax.ShapeDtypeStruct((splits, 1, _LANE), jnp.float32),
        grid_spec=pltpu.PrefetchScalarGridSpec(
            num_scalar_prefetch=0,
            grid=(splits, inner),
            in_specs=[
                pl.BlockSpec((tile, D), big_map),
                pl.BlockSpec((tile, D), big_map),
            ],
            out_specs=pl.BlockSpec((1, 1, _LANE), part_map),
            scratch_shapes=[pltpu.VMEM((1, D), jnp.float32)],
        ),
        compiler_params=pltpu.CompilerParams(
            dimension_semantics=("parallel", "arbitrary"),
            vmem_limit_bytes=_vmem_budgets()[1]),
    )(pred2, tgt2)

    return jnp.sum(loss_parts[:, 0, 0]) / jnp.float32(N * D)


# --------------------------------------------------------------------------
# Loss dispatcher (mirrors the PyTorch `Loss` interface)
# --------------------------------------------------------------------------
class Loss:
    """Loss interface for all designed losses (Pallas-backed)."""

    def __init__(self, config):
        model = config['model']
        if model == 'MaskedCELoss':
            self._fn = lambda batch: masked_ce_loss(
                batch['logits'], batch['targets'], batch['mask'])
            self._predict = lambda logits: jnp.argmax(logits, axis=-1)
        elif model == 'MaskedKLDiv':
            self._fn = lambda batch: masked_kl_loss(
                batch['logits'], batch['target_probs'], batch['mask'])
            self._predict = lambda logits: jnp.argmax(logits, axis=-1)
        elif model == 'MaeLoss':
            self._fn = lambda batch: mae_loss(batch['pred'], batch['target'])
            self._predict = None
        elif model in ('CTC', 'Rnnt', 'Pruned_Rnnt'):
            # TODO(synk): CTC/RNN-T alignment DP recursions have no clean Pallas equivalent here.
            raise ValueError('Not support {} loss in Pallas port'.format(model))
        else:
            raise ValueError('Not support {} loss'.format(model))

    def forward(self, batch):
        return self._fn(batch)

    __call__ = forward

    def predict(self, logits):
        if self._predict is not None:
            return self._predict(logits)


if __name__ == "__main__":
    key = jax.random.PRNGKey(0)
    k1, k2, k3, k4, k5 = jax.random.split(key, 5)

    B, T, V = 2, 8, 32  # batch=2, seq=8, vocab=32

    logits = jax.random.normal(k1, (B, T, V), dtype=jnp.float32)
    targets = jax.random.randint(k2, (B, T), 0, V, dtype=jnp.int32)
    lengths = jnp.array([T, T - 3], dtype=jnp.int32)
    mask = (jnp.arange(T)[None, :] < lengths[:, None]).astype(jnp.float32)

    # MaskedCELoss
    ce = Loss({'model': 'MaskedCELoss', 'config': {}})
    ce_val = ce({'logits': logits, 'targets': targets, 'mask': mask})
    jax.block_until_ready(ce_val)

    # reference check (plain JAX)
    logq = jax.nn.log_softmax(logits, axis=-1)
    nll = -jnp.take_along_axis(logq, targets[..., None], axis=-1)[..., 0]
    ce_ref = jnp.sum(nll * mask) / jnp.sum(mask)
    assert jnp.allclose(ce_val, ce_ref, rtol=1e-5, atol=1e-5)

    # MaskedKLDiv
    tprobs = jax.nn.softmax(jax.random.normal(k3, (B, T, V)), axis=-1)
    kld = Loss({'model': 'MaskedKLDiv', 'config': {}})
    kl_val = kld({'logits': logits, 'target_probs': tprobs, 'mask': mask})
    jax.block_until_ready(kl_val)
    kl_ref = jnp.sum(
        jnp.sum(tprobs * (jnp.log(tprobs) - logq), axis=-1) * mask) / jnp.sum(mask)
    assert jnp.allclose(kl_val, kl_ref, rtol=1e-5, atol=1e-5)

    # MaeLoss
    pred = jax.random.normal(k4, (16, 32), dtype=jnp.float32)
    tgt = jax.random.normal(k5, (16, 32), dtype=jnp.float32)
    mae = Loss({'model': 'MaeLoss', 'config': {}})
    mae_val = mae({'pred': pred, 'target': tgt})
    jax.block_until_ready(mae_val)
    assert jnp.allclose(mae_val, jnp.mean(jnp.abs(pred - tgt)), rtol=1e-5, atol=1e-5)

    # predict path
    _ = jax.block_until_ready(ce.predict(logits))

    print("KERNEL_OK")
</pallas_src>

<mosaic_0001>
module attributes {stable_mosaic.version = 11 : i64} {
  func.func @_masked_ce_kernel(%arg0: i32, %arg1: i32, %arg2: memref<16x32xf32, #tpu.memory_space<vmem>>, %arg3: memref<16x1xi32, #tpu.memory_space<vmem>>, %arg4: memref<16x1xf32, #tpu.memory_space<vmem>>, %arg5: memref<1x1x128xf32, #tpu.memory_space<vmem>>, %arg6: memref<1x1x128xf32, #tpu.memory_space<vmem>>, %arg7: memref<16x1xf32, #tpu.memory_space<vmem>>, %arg8: memref<16x1xf32, #tpu.memory_space<vmem>>) attributes {dimension_semantics = [#tpu.dimension_semantics<parallel>, #tpu.dimension_semantics<arbitrary>], iteration_bounds = array<i64: 1, 1>, scalar_prefetch = 0 : i64, scratch_operands = 2 : i64, tpu.core_type = #tpu.core_type<tc>, window_params = [{transform_indices = @transform_0, window_bounds = array<i64: 16, 32>}, {transform_indices = @transform_1, window_bounds = array<i64: 16, 1>}, {transform_indices = @transform_2, window_bounds = array<i64: 16, 1>}, {transform_indices = @transform_3, window_bounds = array<i64: 1, 1, 128>}, {transform_indices = @transform_4, window_bounds = array<i64: 1, 1, 128>}]} {
    %c0_i32 = arith.constant 0 : i32
    %0 = arith.cmpi eq, %arg1, %c0_i32 : i32
    %1 = arith.extui %0 : i1 to i32
    %c0_i32_0 = arith.constant 0 : i32
    %2 = arith.cmpi ne, %1, %c0_i32_0 : i32
    scf.if %2 {
      %cst_21 = arith.constant 0.000000e+00 : f32
      %35 = vector.broadcast %cst_21 : f32 to vector<16x1xf32>
      %c0_22 = arith.constant 0 : index
      %c0_23 = arith.constant 0 : index
      %36 = vector.load %arg7[%c0_22, %c0_23] : memref<16x1xf32, #tpu.memory_space<vmem>>, vector<16x1xf32>
      tpu.vector_store %arg7[%c0_22, %c0_23], %35 {strides = array<i32>} : memref<16x1xf32, #tpu.memory_space<vmem>>, vector<16x1xf32>,
      %cst_24 = arith.constant 0.000000e+00 : f32
      %37 = vector.broadcast %cst_24 : f32 to vector<16x1xf32>
      %c0_25 = arith.constant 0 : index
      %c0_26 = arith.constant 0 : index
      %38 = vector.load %arg8[%c0_25, %c0_26] : memref<16x1xf32, #tpu.memory_space<vmem>>, vector<16x1xf32>
      tpu.vector_store %arg8[%c0_25, %c0_26], %37 {strides = array<i32>} : memref<16x1xf32, #tpu.memory_space<vmem>>, vector<16x1xf32>,
    } else {
    }
    %c0 = arith.constant 0 : index
    %c0_1 = arith.constant 0 : index
    %3 = vector.load %arg2[%c0, %c0_1] : memref<16x32xf32, #tpu.memory_space<vmem>>, vector<16x32xf32>
    %cst = arith.constant dense<0xFF800000> : vector<16xf32>
    %4 = vector.multi_reduction <maximumf>, %3, %cst [1] : vector<16x32xf32> to vector<16xf32>
    %5 = vector.shape_cast %4 : vector<16xf32> to vector<16x1xf32>
    %6 = vector.broadcast %5 : vector<16x1xf32> to vector<16x32xf32>
    %7 = arith.subf %3, %6 : vector<16x32xf32>
    %8 = math.exp %7 : vector<16x32xf32>
    %cst_2 = arith.constant dense<0.000000e+00> : vector<16xf32>
    %9 = vector.multi_reduction <add>, %8, %cst_2 [1] : vector<16x32xf32> to vector<16xf32>
    %10 = vector.shape_cast %9 : vector<16xf32> to vector<16x1xf32>
    %11 = tpu.iota {dimensions = array<i32: 1>} : vector<16x32xi32>
    %c0_3 = arith.constant 0 : index
    %c0_4 = arith.constant 0 : index
    %12 = vector.load %arg3[%c0_3, %c0_4] : memref<16x1xi32, #tpu.memory_space<vmem>>, vector<16x1xi32>
    %13 = vector.broadcast %12 : vector<16x1xi32> to vector<16x32xi32>
    %14 = arith.cmpi eq, %11, %13 : vector<16x32xi32>
    %cst_5 = arith.constant 0.000000e+00 : f32
    %15 = vector.broadcast %cst_5 : f32 to vector<16x32xf32>
    %16 = arith.select %14, %7, %15 : vector<16x32xi1>, vector<16x32xf32>
    %cst_6 = arith.constant dense<0.000000e+00> : vector<16xf32>
    %17 = vector.multi_reduction <add>, %16, %cst_6 [1] : vector<16x32xf32> to vector<16xf32>
    %18 = vector.shape_cast %17 : vector<16xf32> to vector<16x1xf32>
    %19 = math.log %10 : vector<16x1xf32>
    %20 = arith.subf %19, %18 : vector<16x1xf32>
    %c0_7 = arith.constant 0 : index
    %c0_8 = arith.constant 0 : index
    %21 = vector.load %arg4[%c0_7, %c0_8] : memref<16x1xf32, #tpu.memory_space<vmem>>, vector<16x1xf32>
    %c0_9 = arith.constant 0 : index
    %c0_10 = arith.constant 0 : index
    %22 = vector.load %arg7[%c0_9, %c0_10] : memref<16x1xf32, #tpu.memory_space<vmem>>, vector<16x1xf32>
    %cst_11 = arith.constant 0.000000e+00 : f32
    %23 = vector.broadcast %cst_11 : f32 to vector<16x1xf32>
    %24 = arith.cmpf ogt, %21, %23 : vector<16x1xf32>
    %cst_12 = arith.constant 0.000000e+00 : f32
    %25 = vector.broadcast %cst_12 : f32 to vector<16x1xf32>
    %26 = arith.select %24, %20, %25 : vector<16x1xi1>, vector<16x1xf32>
    %27 = arith.addf %22, %26 : vector<16x1xf32>
    %c0_13 = arith.constant 0 : index
    %c0_14 = arith.constant 0 : index
    %28 = vector.load %arg7[%c0_13, %c0_14] : memref<16x1xf32, #tpu.memory_space<vmem>>, vector<16x1xf32>
    tpu.vector_store %arg7[%c0_13, %c0_14], %27 {strides = array<i32>} : memref<16x1xf32, #tpu.memory_space<vmem>>, vector<16x1xf32>,
    %c0_15 = arith.constant 0 : index
    %c0_16 = arith.constant 0 : index
    %29 = vector.load %arg8[%c0_15, %c0_16] : memref<16x1xf32, #tpu.memory_space<vmem>>, vector<16x1xf32>
    %30 = arith.addf %29, %21 : vector<16x1xf32>
    %c0_17 = arith.constant 0 : index
    %c0_18 = arith.constant 0 : index
    %31 = vector.load %arg8[%c0_17, %c0_18] : memref<16x1xf32, #tpu.memory_space<vmem>>, vector<16x1xf32>
    tpu.vector_store %arg8[%c0_17, %c0_18], %30 {strides = array<i32>} : memref<16x1xf32, #tpu.memory_space<vmem>>, vector<16x1xf32>,
    %c0_i32_19 = arith.constant 0 : i32
    %32 = arith.cmpi eq, %arg1, %c0_i32_19 : i32
    %33 = arith.extui %32 : i1 to i32
    %c0_i32_20 = arith.constant 0 : i32
    %34 = arith.cmpi ne, %33, %c0_i32_20 : i32
    scf.if %34 {
      %c0_21 = arith.constant 0 : index
      %c0_22 = arith.constant 0 : index
      %35 = vector.load %arg7[%c0_21, %c0_22] : memref<16x1xf32, #tpu.memory_space<vmem>>, vector<16x1xf32>
      %36 = vector.shape_cast %35 : vector<16x1xf32> to vector<1x16x1xf32>
      %cst_23 = arith.constant dense<0.000000e+00> : vector<1xf32>
      %37 = vector.multi_reduction <add>, %36, %cst_23 [1, 2] : vector<1x16x1xf32> to vector<1xf32>
      %38 = vector.shape_cast %37 : vector<1xf32> to vector<1x1x1xf32>
      %39 = vector.extract %38[0, 0, 0] : f32 from vector<1x1x1xf32>
      %40 = vector.broadcast %39 : f32 to vector<1x1x128xf32>
      %c0_24 = arith.constant 0 : index
      %c0_25 = arith.constant 0 : index
      %c0_26 = arith.constant 0 : index
      %41 = vector.load %arg5[%c0_24, %c0_25, %c0_26] : memref<1x1x128xf32, #tpu.memory_space<vmem>>, vector<1x1x128xf32>
      tpu.vector_store %arg5[%c0_24, %c0_25, %c0_26], %40 {strides = array<i32>} : memref<1x1x128xf32, #tpu.memory_space<vmem>>, vector<1x1x128xf32>,
      %c0_27 = arith.constant 0 : index
      %c0_28 = arith.constant 0 : index
      %42 = vector.load %arg8[%c0_27, %c0_28] : memref<16x1xf32, #tpu.memory_space<vmem>>, vector<16x1xf32>
      %43 = vector.shape_cast %42 : vector<16x1xf32> to vector<1x16x1xf32>
      %cst_29 = arith.constant dense<0.000000e+00> : vector<1xf32>
      %44 = vector.multi_reduction <add>, %43, %cst_29 [1, 2] : vector<1x16x1xf32> to vector<1xf32>
      %45 = vector.shape_cast %44 : vector<1xf32> to vector<1x1x1xf32>
      %46 = vector.extract %45[0, 0, 0] : f32 from vector<1x1x1xf32>
      %47 = vector.broadcast %46 : f32 to vector<1x1x128xf32>
      %c0_30 = arith.constant 0 : index
      %c0_31 = arith.constant 0 : index
      %c0_32 = arith.constant 0 : index
      %48 = vector.load %arg6[%c0_30, %c0_31, %c0_32] : memref<1x1x128xf32, #tpu.memory_space<vmem>>, vector<1x1x128xf32>
      tpu.vector_store %arg6[%c0_30, %c0_31, %c0_32], %47 {strides = array<i32>} : memref<1x1x128xf32, #tpu.memory_space<vmem>>, vector<1x1x128xf32>,
    } else {
    }
    return
  }
  func.func @transform_0(%arg0: i32, %arg1: i32) -> (i32, i32) {
    %c1_i32 = arith.constant 1 : i32
    %0 = arith.muli %arg0, %c1_i32 : i32
    %1 = arith.addi %0, %arg1 : i32
    %c0_i32 = arith.constant 0 : i32
    %2 = arith.minsi %1, %c0_i32 : i32
    %c0_i32_0 = arith.constant 0 : i32
    %c0_i32_1 = arith.constant 0 : i32
    return %2, %c0_i32_0 : i32, i32
  }
  func.func @transform_1(%arg0: i32, %arg1: i32) -> (i32, i32) {
    %c1_i32 = arith.constant 1 : i32
    %0 = arith.muli %arg0, %c1_i32 : i32
    %1 = arith.addi %0, %arg1 : i32
    %c0_i32 = arith.constant 0 : i32
    %c0_i32_0 = arith.constant 0 : i32
    return %1, %c0_i32 : i32, i32
  }
  func.func @transform_2(%arg0: i32, %arg1: i32) -> (i32, i32) {
    %c1_i32 = arith.constant 1 : i32
    %0 = arith.muli %arg0, %c1_i32 : i32
    %1 = arith.addi %0, %arg1 : i32
    %c0_i32 = arith.constant 0 : i32
    %c0_i32_0 = arith.constant 0 : i32
    return %1, %c0_i32 : i32, i32
  }
  func.func @transform_3(%arg0: i32, %arg1: i32) -> (i32, i32, i32) {
    %c0_i32 = arith.constant 0 : i32
    %c0_i32_0 = arith.constant 0 : i32
    %c0_i32_1 = arith.constant 0 : i32
    return %arg0, %c0_i32, %c0_i32_0 : i32, i32, i32
  }
  func.func @transform_4(%arg0: i32, %arg1: i32) -> (i32, i32, i32) {
    %c0_i32 = arith.constant 0 : i32
    %c0_i32_0 = arith.constant 0 : i32
    %c0_i32_1 = arith.constant 0 : i32
    return %arg0, %c0_i32, %c0_i32_0 : i32, i32, i32
  }
}

</mosaic_0001>

<llo_original>
// kernel: tpu_custom_call.1
$region0: #{tpu_custom_call.1}
  #allocation0 [shape = 'u32[]', space=smem, size = 0x4, offset = 0x4, fixed_abs, tag = 'smem constant byte address 0x4 - core index']
  #allocation1 [shape = 'u32[72,128]{1,0:T(1,128)}', space=vmem, size = 0x9000, scoped, tag = 'internal scratch']
  #allocation2 [shape = 'f32[16,1]{1,0:T(8,128)}', space=vmem, size = 0x2000, scoped, tag = 'scratch operand']
  #allocation3 [shape = 'f32[16,1]{1,0:T(8,128)}', space=vmem, size = 0x2000, scoped, tag = 'scratch operand']
  %s0 = inlined_call_operand.vmem [shape: f32[16,32], index: 0, kind: input, shape index: {}]
  %s1 = inlined_call_operand.vmem [shape: s32[16,1], index: 1, kind: input, shape index: {}]
  %s2 = inlined_call_operand.vmem [shape: f32[16,1], index: 2, kind: input, shape index: {}]
  %s3 = inlined_call_operand.hbm [shape: f32[1,1,128], index: 3, kind: output, shape index: {0}]
  %s4 = inlined_call_operand.hbm [shape: f32[1,1,128], index: 4, kind: output, shape index: {1}]
  %5 = xla_tuple %s3, %s4
  %s6 = sld [smem:[#allocation0]]
  $region38: #{tpu_custom_call.1} parent=0
    _
  %s8 = ssub.s32 1, %s6
  %s9 = scalar_select 0, %s8, %s6
  $region1: #{tpu_custom_call.1} parent=0
    #allocation4 [shape = 'u8[512]{0}', space=vmem, size = 0x400, scoped, tag = 'output window, operand 0, single buffered']
    #allocation5 [shape = 's32[1]{0}', space=sflag, size = 0x4, scoped, tag = 'scoped memory for tpu_custom_call.1']
    #allocation6 [shape = 'u8[512]{0}', space=vmem, size = 0x400, scoped, tag = 'output window, operand 1, single buffered']
    #allocation7 [shape = 's32[1]{0}', space=sflag, size = 0x4, scoped, tag = 'scoped memory for tpu_custom_call.1']
    %10 = vsyncpa [#allocation5], 0
    %11 = vsyncpa [#allocation7], 0
    // Predicated region
    $region2: #{tpu_custom_call.1} parent=1 // pred_check
      _
    $region3: #{tpu_custom_call.1} parent=1 // pred_check_branch
      %13 = sbr.rel (0) target = $region5
    $region4: #{tpu_custom_call.1} parent=1 // pred_region
      %s14 = sadd.s32 0, 0
      %p15 = scmp.lt.s32.totalorder %s14, 0
      %s16 = scalar_select %p15, %s14, 0
      %s17 = smul.u32 2, %s16
      %p18 = scmp.lt.s32.totalorder %s17, 1
      %s19 = scalar_select %p18, %s17, 1
      %s20 = smul.addr %s19, 8
      %s21 = scalar_lea.vmem %s0, %s20
      %s22 = sadd.s32 0, 0
      %p23 = scmp.lt.s32.totalorder %s22, 0
      %s24 = scalar_select %p23, %s22, 0
      %s25 = smul.u32 2, %s24
    $region5: #{tpu_custom_call.1} parent=1 // pred_fallthru
      _
    // Predicated region
    $region6: #{tpu_custom_call.1} parent=1 // pred_check
      _
    $region7: #{tpu_custom_call.1} parent=1 // pred_check_branch
      %27 = sbr.rel (0) target = $region9
    $region8: #{tpu_custom_call.1} parent=1 // pred_region
      %s28 = sadd.s32 0, 0
      %s29 = smul.u32 2, %s28
      %p30 = scmp.lt.s32.totalorder %s29, 1
      %s31 = scalar_select %p30, %s29, 1
      %s32 = smul.addr %s31, 8
      %s33 = scalar_lea.vmem %s1, %s32
      %s34 = sadd.s32 0, 0
      %s35 = smul.u32 2, %s34
    $region9: #{tpu_custom_call.1} parent=1 // pred_fallthru
      _
    // Predicated region
    $region10: #{tpu_custom_call.1} parent=1 // pred_check
      _
    $region11: #{tpu_custom_call.1} parent=1 // pred_check_branch
      %37 = sbr.rel (0) target = $region13
    $region12: #{tpu_custom_call.1} parent=1 // pred_region
      %s38 = sadd.s32 0, 0
      %s39 = smul.u32 2, %s38
      %p40 = scmp.lt.s32.totalorder %s39, 1
      %s41 = scalar_select %p40, %s39, 1
      %s42 = smul.addr %s41, 8
      %s43 = scalar_lea.vmem %s2, %s42
      %s44 = sadd.s32 0, 0
      %s45 = smul.u32 2, %s44
    $region13: #{tpu_custom_call.1} parent=1 // pred_fallthru
      _
    %s46 = sadd.s32 0, 0
    %p47 = scmp.lt.s32.totalorder %s46, 0
    %s48 = scalar_select %p47, %s46, 0
    %s49 = smul.u32 2, %s48
    %p50 = scmp.lt.s32.totalorder %s49, 1
    %s51 = scalar_select %p50, %s49, 1
    %s52 = smul.addr %s51, 8
    %s53 = scalar_lea.vmem %s0, %s52
    %s54 = sadd.s32 0, 0
    %s55 = smul.u32 2, %s54
    %p56 = scmp.lt.s32.totalorder %s55, 1
    %s57 = scalar_select %p56, %s55, 1
    %s58 = smul.addr %s57, 8
    %s59 = scalar_lea.vmem %s1, %s58
    %s60 = sadd.s32 0, 0
    %s61 = smul.u32 2, %s60
    %p62 = scmp.lt.s32.totalorder %s61, 1
    %s63 = scalar_select %p62, %s61, 1
    %s64 = smul.addr %s63, 8
    %s65 = scalar_lea.vmem %s2, %s64
    %s66 = sadd.s32 0, 0
    %p67 = scmp.lt.s32.totalorder %s66, 0
    %s68 = scalar_select %p67, %s66, 0
    %s69 = smul.u32 2, %s68
    %p70 = scmp.lt.s32.totalorder %s69, 1
    %s71 = scalar_select %p70, %s69, 1
    %s72 = smul.addr %s71, 8
    %s73 = scalar_lea.vmem %s0, %s72
    %s74 = sadd.s32 0, 0
    %p75 = scmp.lt.s32.totalorder %s74, 0
    %s76 = scalar_select %p75, %s74, 0
    %s77 = smul.u32 2, %s76
    %s78 = sadd.s32 0, 0
    %s79 = smul.u32 2, %s78
    %p80 = scmp.lt.s32.totalorder %s79, 1
    %s81 = scalar_select %p80, %s79, 1
    %s82 = smul.addr %s81, 8
    %s83 = scalar_lea.vmem %s1, %s82
    %s84 = sadd.s32 0, 0
    %s85 = smul.u32 2, %s84
    %s86 = sadd.s32 0, 0
    %s87 = smul.u32 2, %s86
    %p88 = scmp.lt.s32.totalorder %s87, 1
    %s89 = scalar_select %p88, %s87, 1
    %s90 = smul.addr %s89, 8
    %s91 = scalar_lea.vmem %s2, %s90
    %s92 = sadd.s32 0, 0
    %s93 = smul.u32 2, %s92
    %p94 = scmp.eq.s32.totalorder 0, 0
    // Predicated region
    $region14: #{tpu_custom_call.1} parent=1 // pred_check
      %p95 = pneg %p94
    $region15: #{tpu_custom_call.1} parent=1 // pred_check_branch
      %97 = sbr.rel (%p95) target = $region17
    $region16: #{tpu_custom_call.1} parent=1 // pred_region
      %vm98 = vcmask 7168
      %99 = vst.msk [vmem:[#allocation2] sm:$0xff] %vm98, 0.0
      %100 = vst.msk [vmem:[#allocation2 + $0x8] sm:$0xff] %vm98, 0.0
      %101 = vst.msk [vmem:[#allocation3] sm:$0xff] %vm98, 0.0
      %102 = vst.msk [vmem:[#allocation3 + $0x8] sm:$0xff] %vm98, 0.0
    $region17: #{tpu_custom_call.1} parent=1 // pred_fallthru
      _
    %v103 = vld [vmem:[%s73] sm:$0xff]
    %v104 = vld [vmem:[%s73 + $0x8] sm:$0xff]
    %vm105 = vcmask 261120
    %v106 = vsel %vm105, %v103, -inf
    %107 = vmax.xlane.f32.xlu0 %v106
    %v108 = vpop.xlane.xlu0 %107
    %v109 = vsel %vm105, %v104, -inf
    %110 = vmax.xlane.f32.xlu0 %v109
    %v111 = vpop.xlane.xlu0 %110
    %v112 = vsub.f32 %v103, %v108
    %v113 = vsub.f32 %v104, %v111
    %v114 = vmul.f32 %v112, 1.442695
    %v115 = vpow.pop %v114
    %v116 = vmul.f32 %v113, 1.442695
    %v117 = vpow.pop %v116
    %v118 = vsel %vm105, %v115, 0.0
    %119 = vadd.xlane.f32.xlu0 %v118
    %v120 = vpop.xlane.xlu0 %119
    %v121 = vsel %vm105, %v117, 0.0
    %122 = vadd.xlane.f32.xlu0 %v121
    %v123 = vpop.xlane.xlu0 %122
    %v124 = vlaneseq
    %v125 = vand.u32 %v124, 127
    %v126 = vld [vmem:[%s83] sm:$0xff]
    %v127 = vld [vmem:[%s83 + $0x8] sm:$0xff]
    %128 = vset.pattern.permute.xlu0 0
    %129 = vperm.xlu0 %128, %v126
    %v130 = vpop.permute.xlu0 %129
    %131 = vset.pattern.permute.xlu0 0
    %132 = vperm.xlu0 %131, %v127
    %v133 = vpop.permute.xlu0 %132
    %vm134 = vcmp.eq.s32.totalorder %v125, %v130
    %vm135 = vcmp.eq.s32.totalorder %v125, %v133
    %v136 = vsel %vm134, %v112, 0.0
    %v137 = vsel %vm135, %v113, 0.0
    %v138 = vsel %vm105, %v136, 0.0
    %139 = vadd.xlane.f32.xlu0 %v138
    %v140 = vpop.xlane.xlu0 %139
    %v141 = vsel %vm105, %v137, 0.0
    %142 = vadd.xlane.f32.xlu0 %v141
    %v143 = vpop.xlane.xlu0 %142
    %v144 = vlog2.pop %v120
    %v145 = vmul.f32 %v144, 0.6931472
    %v146 = vlog2.pop %v123
    %v147 = vmul.f32 %v146, 0.6931472
    %v148 = vsub.f32 %v145, %v140
    %v149 = vsub.f32 %v147, %v143
    %v150 = vld [vmem:[%s91] sm:$0xff]
    %v151 = vld [vmem:[%s91 + $0x8] sm:$0xff]
    %v152 = vld [vmem:[#allocation2] sm:$0xff]
    %v153 = vld [vmem:[#allocation2 + $0x8] sm:$0xff]
    %vm154 = vcmp.gt.f32.partialorder %v150, 0.0
    %vm155 = vcmp.gt.f32.partialorder %v151, 0.0
    %v156 = vsel %vm154, %v148, 0.0
    %v157 = vsel %vm155, %v149, 0.0
    %v158 = vadd.f32 %v152, %v156
    %v159 = vadd.f32 %v153, %v157
    %vm160 = vcmask 7168
    %161 = vst.msk [vmem:[#allocation2] sm:$0xff] %vm160, %v158
    %162 = vst.msk [vmem:[#allocation2 + $0x8] sm:$0xff] %vm160, %v159
    %v163 = vld [vmem:[#allocation3] sm:$0xff]
    %v164 = vld [vmem:[#allocation3 + $0x8] sm:$0xff]
    %v165 = vadd.f32 %v163, %v150
    %v166 = vadd.f32 %v164, %v151
    %167 = vst.msk [vmem:[#allocation3] sm:$0xff] %vm160, %v165
    %168 = vst.msk [vmem:[#allocation3 + $0x8] sm:$0xff] %vm160, %v166
    // Predicated region
    $region18: #{tpu_custom_call.1} parent=1 // pred_check
      %p169 = pneg %p94
    $region19: #{tpu_custom_call.1} parent=1 // pred_check_branch
      %171 = sbr.rel (%p169) target = $region21
    $region20: #{tpu_custom_call.1} parent=1 // pred_region
      %v172 = vld [vmem:[#allocation2] sm:$0xff]
      %v173 = vld [vmem:[#allocation2 + $0x8] sm:$0xff]
      %v174 = vsel %vm160, %v172, 0.0
      %v175 = vsel %vm160, %v173, 0.0
      %v176 = vadd.f32 %v174, %v175
      %177 = vadd.xlane.f32.xlu0 %v176
      %v178 = vpop.xlane.xlu0 %177
      %v179 = vrot.slane %v178, 4
      %v180 = vadd.f32 %v178, %v179
      %v181 = vrot.slane %v180, 2
      %v182 = vadd.f32 %v180, %v181
      %v183 = vrot.slane %v182, 1
      %v184 = vadd.f32 %v182, %v183
      %s185 = vtos %v184
      %v186 = vstv %s185
      %187 = vst [vmem:[#allocation4] sm:$0x1] %v186
      %v188 = vld [vmem:[#allocation3] sm:$0xff]
      %v189 = vld [vmem:[#allocation3 + $0x8] sm:$0xff]
      %v190 = vsel %vm160, %v188, 0.0
      %v191 = vsel %vm160, %v189, 0.0
      %v192 = vadd.f32 %v190, %v191
      %193 = vadd.xlane.f32.xlu0 %v192
      %v194 = vpop.xlane.xlu0 %193
      %v195 = vrot.slane %v194, 4
      %v196 = vadd.f32 %v194, %v195
      %v197 = vrot.slane %v196, 2
      %v198 = vadd.f32 %v196, %v197
      %v199 = vrot.slane %v198, 1
      %v200 = vadd.f32 %v198, %v199
      %s201 = vtos %v200
      %v202 = vstv %s201
      %203 = vst [vmem:[#allocation6] sm:$0x1] %v202
    $region21: #{tpu_custom_call.1} parent=1 // pred_fallthru
      _
    // Predicated region
    $region22: #{tpu_custom_call.1} parent=1 // pred_check
      _
    $region23: #{tpu_custom_call.1} parent=1 // pred_check_branch
      %205 = sbr.rel (0) target = $region25
    $region24: #{tpu_custom_call.1} parent=1 // pred_region
      %207 = vsyncadd [#allocation5], 0
      %s209 = sshll.u32 [#allocation4], 4
      %s210 = int_to_ptr.vmem [resolvable:$true] %s209
      %s211 = sshll.u32 %s3, 4
      %s212 = int_to_ptr.hbm [resolvable:$true] %s211
      %214 = dma.vmem_to_hbm [thread:$0]  %s210, 16, %s212, [#allocation5]
    $region25: #{tpu_custom_call.1} parent=1 // pred_fallthru
      _
    // Predicated region
    $region26: #{tpu_custom_call.1} parent=1 // pred_check
      _
    $region27: #{tpu_custom_call.1} parent=1 // pred_check_branch
      %216 = sbr.rel (0) target = $region29
    $region28: #{tpu_custom_call.1} parent=1 // pred_region
      %218 = vsyncadd [#allocation7], 0
      %s220 = sshll.u32 [#allocation6], 4
      %s221 = int_to_ptr.vmem [resolvable:$true] %s220
      %s222 = sshll.u32 %s4, 4
      %s223 = int_to_ptr.hbm [resolvable:$true] %s222
      %225 = dma.vmem_to_hbm [thread:$0]  %s221, 16, %s223, [#allocation7]
    $region29: #{tpu_custom_call.1} parent=1 // pred_fallthru
      _
    // Predicated region
    $region30: #{tpu_custom_call.1} parent=1 // pred_check
      _
    $region31: #{tpu_custom_call.1} parent=1 // pred_check_branch
      %227 = sbr.rel (0) target = $region33
    $region32: #{tpu_custom_call.1} parent=1 // pred_region
      %229 = dma.done [#allocation5], 16
    $region33: #{tpu_custom_call.1} parent=1 // pred_fallthru
      _
    // Predicated region
    $region34: #{tpu_custom_call.1} parent=1 // pred_check
      _
    $region35: #{tpu_custom_call.1} parent=1 // pred_check_branch
      %231 = sbr.rel (0) target = $region37
    $region36: #{tpu_custom_call.1} parent=1 // pred_region
      %233 = dma.done [#allocation7], 16
    $region37: #{tpu_custom_call.1} parent=1 // pred_fallthru
      _
    %234 = vsyncpa [#allocation5], 1
    %235 = vsyncpa [#allocation7], 1

</llo_original>
